<compile_context>
chip_gen: v7x
topology: tpu7x:2x2x1
jax: 0.10.0
libtpu: 0.0.40
codegen_flags: <defaults>
</compile_context>

<pallas_src>
import functools

import jax
import jax.numpy as jnp
from jax.experimental import pallas as pl
from jax.experimental.pallas import tpu as pltpu

_EPS = 1e-5  # nn.InstanceNorm2d default eps (affine=False, biased variance)


def _bottleneck_kernel(x_ref, m_ref, w_ref, o_ref, *, shifts, hw):
    """One grid step: B images, each row of the block is one image-channel
    plane flattened to `hw` lanes.

    x_ref: (B*C, HW) f32 activations
    m_ref: (9, HW)   f32 0/1 validity masks, one per conv tap
    w_ref: (3, B*C, 9*B*C) f32 block-diagonal im2col weights (one per layer)
    o_ref: (B*C, HW) f32 output
    """
    x = x_ref[...]                                           # (R, HW)
    # Load the 9 tap masks once; each is (1, HW) and broadcasts over rows.
    masks = [m_ref[pl.ds(k, 1), :] for k in range(9)]

    def im2col(act):
        # Build the (9*R, HW) tap matrix fully in registers: each tap is a
        # circular lane roll (XLU) with out-of-image positions masked to zero.
        cols = []
        for k, s in enumerate(shifts):
            rolled = act if s == 0 else pltpu.roll(act, shift=(-s) % hw, axis=1)
            cols.append(rolled * masks[k])
        return jnp.concatenate(cols, axis=0)                 # (9R, HW)

    act = x
    for layer in range(3):
        # 3x3 dilated conv (stride 1, padding d, no bias) as one MXU matmul.
        conv = jnp.dot(w_ref[layer], im2col(act),
                       preferred_element_type=jnp.float32)   # (R, HW)
        # InstanceNorm2d (affine=False, biased variance) per row = per (n, c).
        mean = jnp.mean(conv, axis=1, keepdims=True)
        cen = conv - mean
        var = jnp.mean(cen * cen, axis=1, keepdims=True)
        y = cen * jax.lax.rsqrt(var + _EPS)
        # ReLU after layers 0 and 1 only; layer 2 ends with the norm.
        act = jnp.maximum(y, 0.0) if layer < 2 else y

    # Residual add (identity = original input) + final ReLU.
    o_ref[...] = jnp.maximum(act + x, 0.0)


def bottleneck_forward(x, w1, w2, w3, *, dilation=1, batch_block=32):
    """x: (N, C, H, W) f32; w*: (C, C, 3, 3) f32 (PyTorch OIHW)."""
    N, C, H, W = x.shape
    HW = H * W
    d = dilation
    assert HW % 128 == 0, "flattened spatial size must be a multiple of 128"

    # Images per grid step: largest divisor of N that is <= batch_block.
    B = 1
    for cand in range(min(N, batch_block), 0, -1):
        if N % cand == 0:
            B = cand
            break
    R = B * C

    # Static lane shifts for the 9 taps (ky-major, kx-minor ordering).
    shifts = tuple(((ky - 1) * d) * W + (kx - 1) * d
                   for ky in range(3) for kx in range(3))

    # 0/1 validity masks per tap (same for every image/channel row).
    p = jnp.arange(HW, dtype=jnp.int32)
    yy = p // W
    xx = p % W
    mask_rows = []
    for ky in range(3):
        for kx in range(3):
            dy = (ky - 1) * d
            dx = (kx - 1) * d
            ok = ((yy + dy >= 0) & (yy + dy < H) &
                  (xx + dx >= 0) & (xx + dx < W))
            mask_rows.append(ok.astype(jnp.float32))
    masks = jnp.stack(mask_rows, axis=0)                     # (9, HW)

    # Block-diagonal (over the B images in a block) im2col weight matrices.
    def block_diag_weights(w):
        wk = w.astype(jnp.float32).reshape(C, C, 9)          # (co, ci, k)
        wk = jnp.transpose(wk, (2, 0, 1))                    # (k, co, ci)
        eye = jnp.eye(B, dtype=jnp.float32)
        bd = jnp.einsum('koi,nm->knomi', wk, eye).reshape(9, R, R)
        return jnp.concatenate([bd[k] for k in range(9)], axis=1)  # (R, 9R)

    w_all = jnp.stack([block_diag_weights(w1),
                       block_diag_weights(w2),
                       block_diag_weights(w3)], axis=0)      # (3, R, 9R)

    x_flat = x.astype(jnp.float32).reshape(N * C, HW)        # row = n*C + c

    kernel = functools.partial(_bottleneck_kernel, shifts=shifts, hw=HW)
    out_flat = pl.pallas_call(
        kernel,
        out_shape=jax.ShapeDtypeStruct((N * C, HW), jnp.float32),
        grid=(N // B,),
        in_specs=[
            pl.BlockSpec((R, HW), lambda i: (i, 0)),          # activations
            pl.BlockSpec((9, HW), lambda i: (0, 0)),          # tap masks
            pl.BlockSpec((3, R, 9 * R), lambda i: (0, 0, 0)),  # weights
        ],
        out_specs=pl.BlockSpec((R, HW), lambda i: (i, 0)),
        compiler_params=pltpu.CompilerParams(
            dimension_semantics=("parallel",)),
    )(x_flat, masks, w_all)

    return out_flat.reshape(N, C, H, W)


def _reference(x, w1, w2, w3, *, d=1):
    """Pure-JAX reference matching the PyTorch module semantics."""
    def conv(h, w):
        return jax.lax.conv_general_dilated(
            h, w, window_strides=(1, 1), padding=[(d, d), (d, d)],
            rhs_dilation=(d, d), dimension_numbers=("NCHW", "OIHW", "NCHW"))

    def inorm(h):
        m = jnp.mean(h, axis=(2, 3), keepdims=True)
        v = jnp.mean((h - m) ** 2, axis=(2, 3), keepdims=True)
        return (h - m) * jax.lax.rsqrt(v + _EPS)

    out = jax.nn.relu(inorm(conv(x, w1)))
    out = jax.nn.relu(inorm(conv(out, w2)))
    out = inorm(conv(out, w3))
    return jax.nn.relu(out + x)


if __name__ == "__main__":
    N, C, H, W = 2, 4, 16, 16   # batch=2, in_planes=planes=4, 16x16 spatial
    dilation = 1

    key = jax.random.PRNGKey(0)
    kx_, k1, k2, k3 = jax.random.split(key, 4)
    x = jax.random.normal(kx_, (N, C, H, W), jnp.float32)

    fan_in = C * 3 * 3
    scale = (2.0 / fan_in) ** 0.5  # deterministic He-style init
    w1 = jax.random.normal(k1, (C, C, 3, 3), jnp.float32) * scale
    w2 = jax.random.normal(k2, (C, C, 3, 3), jnp.float32) * scale
    w3 = jax.random.normal(k3, (C, C, 3, 3), jnp.float32) * scale

    out = jax.block_until_ready(bottleneck_forward(x, w1, w2, w3,
                                                   dilation=dilation))
    ref = jax.block_until_ready(_reference(x, w1, w2, w3, d=dilation))

    assert out.shape == (N, C, H, W), out.shape
    max_err = float(jnp.max(jnp.abs(out - ref)))
    assert max_err < 2e-3, max_err
    print("KERNEL_OK")
</pallas_src>

<mosaic_0001>
module attributes {stable_mosaic.version = 11 : i64} {
  func.func @_bottleneck_kernel(%arg0: i32, %arg1: memref<8x256xf32, #tpu.memory_space<vmem>>, %arg2: memref<9x256xf32, #tpu.memory_space<vmem>>, %arg3: memref<3x8x72xf32, #tpu.memory_space<vmem>>, %arg4: memref<8x256xf32, #tpu.memory_space<vmem>>) attributes {dimension_semantics = [#tpu.dimension_semantics<parallel>], iteration_bounds = array<i64: 1>, scalar_prefetch = 0 : i64, scratch_operands = 0 : i64, tpu.core_type = #tpu.core_type<tc>, window_params = [{transform_indices = @transform_0, window_bounds = array<i64: 8, 256>}, {pipeline_mode = #tpu.pipeline_mode<synchronous>, transform_indices = @transform_1, window_bounds = array<i64: 9, 256>}, {pipeline_mode = #tpu.pipeline_mode<synchronous>, transform_indices = @transform_2, window_bounds = array<i64: 3, 8, 72>}, {transform_indices = @transform_3, window_bounds = array<i64: 8, 256>}]} {
    %c0 = arith.constant 0 : index
    %c0_0 = arith.constant 0 : index
    %0 = vector.load %arg1[%c0, %c0_0] : memref<8x256xf32, #tpu.memory_space<vmem>>, vector<8x256xf32>
    %c0_1 = arith.constant 0 : index
    %c0_2 = arith.constant 0 : index
    %1 = vector.load %arg2[%c0_1, %c0_2] : memref<9x256xf32, #tpu.memory_space<vmem>>, vector<1x256xf32>
    %c1 = arith.constant 1 : index
    %c0_3 = arith.constant 0 : index
    %2 = vector.load %arg2[%c1, %c0_3] : memref<9x256xf32, #tpu.memory_space<vmem>>, vector<1x256xf32>
    %c2 = arith.constant 2 : index
    %c0_4 = arith.constant 0 : index
    %3 = vector.load %arg2[%c2, %c0_4] : memref<9x256xf32, #tpu.memory_space<vmem>>, vector<1x256xf32>
    %c3 = arith.constant 3 : index
    %c0_5 = arith.constant 0 : index
    %4 = vector.load %arg2[%c3, %c0_5] : memref<9x256xf32, #tpu.memory_space<vmem>>, vector<1x256xf32>
    %c4 = arith.constant 4 : index
    %c0_6 = arith.constant 0 : index
    %5 = vector.load %arg2[%c4, %c0_6] : memref<9x256xf32, #tpu.memory_space<vmem>>, vector<1x256xf32>
    %c5 = arith.constant 5 : index
    %c0_7 = arith.constant 0 : index
    %6 = vector.load %arg2[%c5, %c0_7] : memref<9x256xf32, #tpu.memory_space<vmem>>, vector<1x256xf32>
    %c6 = arith.constant 6 : index
    %c0_8 = arith.constant 0 : index
    %7 = vector.load %arg2[%c6, %c0_8] : memref<9x256xf32, #tpu.memory_space<vmem>>, vector<1x256xf32>
    %c7 = arith.constant 7 : index
    %c0_9 = arith.constant 0 : index
    %8 = vector.load %arg2[%c7, %c0_9] : memref<9x256xf32, #tpu.memory_space<vmem>>, vector<1x256xf32>
    %c8 = arith.constant 8 : index
    %c0_10 = arith.constant 0 : index
    %9 = vector.load %arg2[%c8, %c0_10] : memref<9x256xf32, #tpu.memory_space<vmem>>, vector<1x256xf32>
    %c0_11 = arith.constant 0 : index
    %c0_12 = arith.constant 0 : index
    %c0_13 = arith.constant 0 : index
    %10 = vector.load %arg3[%c0_11, %c0_12, %c0_13] : memref<3x8x72xf32, #tpu.memory_space<vmem>>, vector<1x8x72xf32>
    %11 = vector.shape_cast %10 : vector<1x8x72xf32> to vector<8x72xf32>
    %c17_i32 = arith.constant 17 : i32
    %12 = tpu.dynamic_rotate %0 by %c17_i32 dim 1 : vector<8x256xf32>, i32 -> vector<8x256xf32>
    %13 = vector.broadcast %1 : vector<1x256xf32> to vector<8x256xf32>
    %14 = arith.mulf %12, %13 : vector<8x256xf32>
    %c16_i32 = arith.constant 16 : i32
    %15 = tpu.dynamic_rotate %0 by %c16_i32 dim 1 : vector<8x256xf32>, i32 -> vector<8x256xf32>
    %16 = vector.broadcast %2 : vector<1x256xf32> to vector<8x256xf32>
    %17 = arith.mulf %15, %16 : vector<8x256xf32>
    %c15_i32 = arith.constant 15 : i32
    %18 = tpu.dynamic_rotate %0 by %c15_i32 dim 1 : vector<8x256xf32>, i32 -> vector<8x256xf32>
    %19 = vector.broadcast %3 : vector<1x256xf32> to vector<8x256xf32>
    %20 = arith.mulf %18, %19 : vector<8x256xf32>
    %c1_i32 = arith.constant 1 : i32
    %21 = tpu.dynamic_rotate %0 by %c1_i32 dim 1 : vector<8x256xf32>, i32 -> vector<8x256xf32>
    %22 = vector.broadcast %4 : vector<1x256xf32> to vector<8x256xf32>
    %23 = arith.mulf %21, %22 : vector<8x256xf32>
    %24 = vector.broadcast %5 : vector<1x256xf32> to vector<8x256xf32>
    %25 = arith.mulf %0, %24 : vector<8x256xf32>
    %c255_i32 = arith.constant 255 : i32
    %26 = tpu.dynamic_rotate %0 by %c255_i32 dim 1 : vector<8x256xf32>, i32 -> vector<8x256xf32>
    %27 = vector.broadcast %6 : vector<1x256xf32> to vector<8x256xf32>
    %28 = arith.mulf %26, %27 : vector<8x256xf32>
    %c241_i32 = arith.constant 241 : i32
    %29 = tpu.dynamic_rotate %0 by %c241_i32 dim 1 : vector<8x256xf32>, i32 -> vector<8x256xf32>
    %30 = vector.broadcast %7 : vector<1x256xf32> to vector<8x256xf32>
    %31 = arith.mulf %29, %30 : vector<8x256xf32>
    %c240_i32 = arith.constant 240 : i32
    %32 = tpu.dynamic_rotate %0 by %c240_i32 dim 1 : vector<8x256xf32>, i32 -> vector<8x256xf32>
    %33 = vector.broadcast %8 : vector<1x256xf32> to vector<8x256xf32>
    %34 = arith.mulf %32, %33 : vector<8x256xf32>
    %c239_i32 = arith.constant 239 : i32
    %35 = tpu.dynamic_rotate %0 by %c239_i32 dim 1 : vector<8x256xf32>, i32 -> vector<8x256xf32>
    %36 = vector.broadcast %9 : vector<1x256xf32> to vector<8x256xf32>
    %37 = arith.mulf %35, %36 : vector<8x256xf32>
    %38 = tpu.concatenate %14, %17, %20, %23, %25, %28, %31, %34, %37 in 0 : vector<8x256xf32>, vector<8x256xf32>, vector<8x256xf32>, vector<8x256xf32>, vector<8x256xf32>, vector<8x256xf32>, vector<8x256xf32>, vector<8x256xf32>, vector<8x256xf32> -> vector<72x256xf32>
    %cst = arith.constant dense<0.000000e+00> : vector<8x256xf32>
    %39 = tpu.matmul %11, %38, %cst {dimension_numbers = #tpu.dot_dimension_numbers<[1], [0], [0], [1], [0, 0, 1, 1], [], []>} : vector<8x72xf32>, vector<72x256xf32>, vector<8x256xf32> -> vector<8x256xf32>
    %cst_14 = arith.constant dense<0.000000e+00> : vector<8xf32>
    %40 = vector.multi_reduction <add>, %39, %cst_14 [1] : vector<8x256xf32> to vector<8xf32>
    %41 = vector.shape_cast %40 : vector<8xf32> to vector<8x1xf32>
    %cst_15 = arith.constant 2.560000e+02 : f32
    %42 = vector.broadcast %cst_15 : f32 to vector<8x1xf32>
    %43 = arith.divf %41, %42 : vector<8x1xf32>
    %44 = vector.broadcast %43 : vector<8x1xf32> to vector<8x256xf32>
    %45 = arith.subf %39, %44 : vector<8x256xf32>
    %46 = arith.mulf %45, %45 : vector<8x256xf32>
    %cst_16 = arith.constant dense<0.000000e+00> : vector<8xf32>
    %47 = vector.multi_reduction <add>, %46, %cst_16 [1] : vector<8x256xf32> to vector<8xf32>
    %48 = vector.shape_cast %47 : vector<8xf32> to vector<8x1xf32>
    %cst_17 = arith.constant 2.560000e+02 : f32
    %49 = vector.broadcast %cst_17 : f32 to vector<8x1xf32>
    %50 = arith.divf %48, %49 : vector<8x1xf32>
    %cst_18 = arith.constant 9.99999974E-6 : f32
    %51 = vector.broadcast %cst_18 : f32 to vector<8x1xf32>
    %52 = arith.addf %50, %51 : vector<8x1xf32>
    %53 = math.rsqrt %52 : vector<8x1xf32>
    %54 = vector.broadcast %53 : vector<8x1xf32> to vector<8x256xf32>
    %55 = arith.mulf %45, %54 : vector<8x256xf32>
    %cst_19 = arith.constant 0.000000e+00 : f32
    %56 = vector.broadcast %cst_19 : f32 to vector<8x256xf32>
    %57 = arith.maximumf %55, %56 : vector<8x256xf32>
    %c1_20 = arith.constant 1 : index
    %c0_21 = arith.constant 0 : index
    %c0_22 = arith.constant 0 : index
    %58 = vector.load %arg3[%c1_20, %c0_21, %c0_22] : memref<3x8x72xf32, #tpu.memory_space<vmem>>, vector<1x8x72xf32>
    %59 = vector.shape_cast %58 : vector<1x8x72xf32> to vector<8x72xf32>
    %c17_i32_23 = arith.constant 17 : i32
    %60 = tpu.dynamic_rotate %57 by %c17_i32_23 dim 1 : vector<8x256xf32>, i32 -> vector<8x256xf32>
    %61 = vector.broadcast %1 : vector<1x256xf32> to vector<8x256xf32>
    %62 = arith.mulf %60, %61 : vector<8x256xf32>
    %c16_i32_24 = arith.constant 16 : i32
    %63 = tpu.dynamic_rotate %57 by %c16_i32_24 dim 1 : vector<8x256xf32>, i32 -> vector<8x256xf32>
    %64 = vector.broadcast %2 : vector<1x256xf32> to vector<8x256xf32>
    %65 = arith.mulf %63, %64 : vector<8x256xf32>
    %c15_i32_25 = arith.constant 15 : i32
    %66 = tpu.dynamic_rotate %57 by %c15_i32_25 dim 1 : vector<8x256xf32>, i32 -> vector<8x256xf32>
    %67 = vector.broadcast %3 : vector<1x256xf32> to vector<8x256xf32>
    %68 = arith.mulf %66, %67 : vector<8x256xf32>
    %c1_i32_26 = arith.constant 1 : i32
    %69 = tpu.dynamic_rotate %57 by %c1_i32_26 dim 1 : vector<8x256xf32>, i32 -> vector<8x256xf32>
    %70 = vector.broadcast %4 : vector<1x256xf32> to vector<8x256xf32>
    %71 = arith.mulf %69, %70 : vector<8x256xf32>
    %72 = vector.broadcast %5 : vector<1x256xf32> to vector<8x256xf32>
    %73 = arith.mulf %57, %72 : vector<8x256xf32>
    %c255_i32_27 = arith.constant 255 : i32
    %74 = tpu.dynamic_rotate %57 by %c255_i32_27 dim 1 : vector<8x256xf32>, i32 -> vector<8x256xf32>
    %75 = vector.broadcast %6 : vector<1x256xf32> to vector<8x256xf32>
    %76 = arith.mulf %74, %75 : vector<8x256xf32>
    %c241_i32_28 = arith.constant 241 : i32
    %77 = tpu.dynamic_rotate %57 by %c241_i32_28 dim 1 : vector<8x256xf32>, i32 -> vector<8x256xf32>
    %78 = vector.broadcast %7 : vector<1x256xf32> to vector<8x256xf32>
    %79 = arith.mulf %77, %78 : vector<8x256xf32>
    %c240_i32_29 = arith.constant 240 : i32
    %80 = tpu.dynamic_rotate %57 by %c240_i32_29 dim 1 : vector<8x256xf32>, i32 -> vector<8x256xf32>
    %81 = vector.broadcast %8 : vector<1x256xf32> to vector<8x256xf32>
    %82 = arith.mulf %80, %81 : vector<8x256xf32>
    %c239_i32_30 = arith.constant 239 : i32
    %83 = tpu.dynamic_rotate %57 by %c239_i32_30 dim 1 : vector<8x256xf32>, i32 -> vector<8x256xf32>
    %84 = vector.broadcast %9 : vector<1x256xf32> to vector<8x256xf32>
    %85 = arith.mulf %83, %84 : vector<8x256xf32>
    %86 = tpu.concatenate %62, %65, %68, %71, %73, %76, %79, %82, %85 in 0 : vector<8x256xf32>, vector<8x256xf32>, vector<8x256xf32>, vector<8x256xf32>, vector<8x256xf32>, vector<8x256xf32>, vector<8x256xf32>, vector<8x256xf32>, vector<8x256xf32> -> vector<72x256xf32>
    %cst_31 = arith.constant dense<0.000000e+00> : vector<8x256xf32>
    %87 = tpu.matmul %59, %86, %cst_31 {dimension_numbers = #tpu.dot_dimension_numbers<[1], [0], [0], [1], [0, 0, 1, 1], [], []>} : vector<8x72xf32>, vector<72x256xf32>, vector<8x256xf32> -> vector<8x256xf32>
    %cst_32 = arith.constant dense<0.000000e+00> : vector<8xf32>
    %88 = vector.multi_reduction <add>, %87, %cst_32 [1] : vector<8x256xf32> to vector<8xf32>
    %89 = vector.shape_cast %88 : vector<8xf32> to vector<8x1xf32>
    %cst_33 = arith.constant 2.560000e+02 : f32
    %90 = vector.broadcast %cst_33 : f32 to vector<8x1xf32>
    %91 = arith.divf %89, %90 : vector<8x1xf32>
    %92 = vector.broadcast %91 : vector<8x1xf32> to vector<8x256xf32>
    %93 = arith.subf %87, %92 : vector<8x256xf32>
    %94 = arith.mulf %93, %93 : vector<8x256xf32>
    %cst_34 = arith.constant dense<0.000000e+00> : vector<8xf32>
    %95 = vector.multi_reduction <add>, %94, %cst_34 [1] : vector<8x256xf32> to vector<8xf32>
    %96 = vector.shape_cast %95 : vector<8xf32> to vector<8x1xf32>
    %cst_35 = arith.constant 2.560000e+02 : f32
    %97 = vector.broadcast %cst_35 : f32 to vector<8x1xf32>
    %98 = arith.divf %96, %97 : vector<8x1xf32>
    %cst_36 = arith.constant 9.99999974E-6 : f32
    %99 = vector.broadcast %cst_36 : f32 to vector<8x1xf32>
    %100 = arith.addf %98, %99 : vector<8x1xf32>
    %101 = math.rsqrt %100 : vector<8x1xf32>
    %102 = vector.broadcast %101 : vector<8x1xf32> to vector<8x256xf32>
    %103 = arith.mulf %93, %102 : vector<8x256xf32>
    %cst_37 = arith.constant 0.000000e+00 : f32
    %104 = vector.broadcast %cst_37 : f32 to vector<8x256xf32>
    %105 = arith.maximumf %103, %104 : vector<8x256xf32>
    %c2_38 = arith.constant 2 : index
    %c0_39 = arith.constant 0 : index
    %c0_40 = arith.constant 0 : index
    %106 = vector.load %arg3[%c2_38, %c0_39, %c0_40] : memref<3x8x72xf32, #tpu.memory_space<vmem>>, vector<1x8x72xf32>
    %107 = vector.shape_cast %106 : vector<1x8x72xf32> to vector<8x72xf32>
    %c17_i32_41 = arith.constant 17 : i32
    %108 = tpu.dynamic_rotate %105 by %c17_i32_41 dim 1 : vector<8x256xf32>, i32 -> vector<8x256xf32>
    %109 = vector.broadcast %1 : vector<1x256xf32> to vector<8x256xf32>
    %110 = arith.mulf %108, %109 : vector<8x256xf32>
    %c16_i32_42 = arith.constant 16 : i32
    %111 = tpu.dynamic_rotate %105 by %c16_i32_42 dim 1 : vector<8x256xf32>, i32 -> vector<8x256xf32>
    %112 = vector.broadcast %2 : vector<1x256xf32> to vector<8x256xf32>
    %113 = arith.mulf %111, %112 : vector<8x256xf32>
    %c15_i32_43 = arith.constant 15 : i32
    %114 = tpu.dynamic_rotate %105 by %c15_i32_43 dim 1 : vector<8x256xf32>, i32 -> vector<8x256xf32>
    %115 = vector.broadcast %3 : vector<1x256xf32> to vector<8x256xf32>
    %116 = arith.mulf %114, %115 : vector<8x256xf32>
    %c1_i32_44 = arith.constant 1 : i32
    %117 = tpu.dynamic_rotate %105 by %c1_i32_44 dim 1 : vector<8x256xf32>, i32 -> vector<8x256xf32>
    %118 = vector.broadcast %4 : vector<1x256xf32> to vector<8x256xf32>
    %119 = arith.mulf %117, %118 : vector<8x256xf32>
    %120 = vector.broadcast %5 : vector<1x256xf32> to vector<8x256xf32>
    %121 = arith.mulf %105, %120 : vector<8x256xf32>
    %c255_i32_45 = arith.constant 255 : i32
    %122 = tpu.dynamic_rotate %105 by %c255_i32_45 dim 1 : vector<8x256xf32>, i32 -> vector<8x256xf32>
    %123 = vector.broadcast %6 : vector<1x256xf32> to vector<8x256xf32>
    %124 = arith.mulf %122, %123 : vector<8x256xf32>
    %c241_i32_46 = arith.constant 241 : i32
    %125 = tpu.dynamic_rotate %105 by %c241_i32_46 dim 1 : vector<8x256xf32>, i32 -> vector<8x256xf32>
    %126 = vector.broadcast %7 : vector<1x256xf32> to vector<8x256xf32>
    %127 = arith.mulf %125, %126 : vector<8x256xf32>
    %c240_i32_47 = arith.constant 240 : i32
    %128 = tpu.dynamic_rotate %105 by %c240_i32_47 dim 1 : vector<8x256xf32>, i32 -> vector<8x256xf32>
    %129 = vector.broadcast %8 : vector<1x256xf32> to vector<8x256xf32>
    %130 = arith.mulf %128, %129 : vector<8x256xf32>
    %c239_i32_48 = arith.constant 239 : i32
    %131 = tpu.dynamic_rotate %105 by %c239_i32_48 dim 1 : vector<8x256xf32>, i32 -> vector<8x256xf32>
    %132 = vector.broadcast %9 : vector<1x256xf32> to vector<8x256xf32>
    %133 = arith.mulf %131, %132 : vector<8x256xf32>
    %134 = tpu.concatenate %110, %113, %116, %119, %121, %124, %127, %130, %133 in 0 : vector<8x256xf32>, vector<8x256xf32>, vector<8x256xf32>, vector<8x256xf32>, vector<8x256xf32>, vector<8x256xf32>, vector<8x256xf32>, vector<8x256xf32>, vector<8x256xf32> -> vector<72x256xf32>
    %cst_49 = arith.constant dense<0.000000e+00> : vector<8x256xf32>
    %135 = tpu.matmul %107, %134, %cst_49 {dimension_numbers = #tpu.dot_dimension_numbers<[1], [0], [0], [1], [0, 0, 1, 1], [], []>} : vector<8x72xf32>, vector<72x256xf32>, vector<8x256xf32> -> vector<8x256xf32>
    %cst_50 = arith.constant dense<0.000000e+00> : vector<8xf32>
    %136 = vector.multi_reduction <add>, %135, %cst_50 [1] : vector<8x256xf32> to vector<8xf32>
    %137 = vector.shape_cast %136 : vector<8xf32> to vector<8x1xf32>
    %cst_51 = arith.constant 2.560000e+02 : f32
    %138 = vector.broadcast %cst_51 : f32 to vector<8x1xf32>
    %139 = arith.divf %137, %138 : vector<8x1xf32>
    %140 = vector.broadcast %139 : vector<8x1xf32> to vector<8x256xf32>
    %141 = arith.subf %135, %140 : vector<8x256xf32>
    %142 = arith.mulf %141, %141 : vector<8x256xf32>
    %cst_52 = arith.constant dense<0.000000e+00> : vector<8xf32>
    %143 = vector.multi_reduction <add>, %142, %cst_52 [1] : vector<8x256xf32> to vector<8xf32>
    %144 = vector.shape_cast %143 : vector<8xf32> to vector<8x1xf32>
    %cst_53 = arith.constant 2.560000e+02 : f32
    %145 = vector.broadcast %cst_53 : f32 to vector<8x1xf32>
    %146 = arith.divf %144, %145 : vector<8x1xf32>
    %cst_54 = arith.constant 9.99999974E-6 : f32
    %147 = vector.broadcast %cst_54 : f32 to vector<8x1xf32>
    %148 = arith.addf %146, %147 : vector<8x1xf32>
    %149 = math.rsqrt %148 : vector<8x1xf32>
    %150 = vector.broadcast %149 : vector<8x1xf32> to vector<8x256xf32>
    %151 = arith.mulf %141, %150 : vector<8x256xf32>
    %152 = arith.addf %151, %0 : vector<8x256xf32>
    %cst_55 = arith.constant 0.000000e+00 : f32
    %153 = vector.broadcast %cst_55 : f32 to vector<8x256xf32>
    %154 = arith.maximumf %152, %153 : vector<8x256xf32>
    %c0_56 = arith.constant 0 : index
    %c0_57 = arith.constant 0 : index
    %155 = vector.load %arg4[%c0_56, %c0_57] : memref<8x256xf32, #tpu.memory_space<vmem>>, vector<8x256xf32>
    tpu.vector_store %arg4[%c0_56, %c0_57], %154 {strides = array<i32>} : memref<8x256xf32, #tpu.memory_space<vmem>>, vector<8x256xf32>,
    return
  }
  func.func @transform_0(%arg0: i32) -> (i32, i32) {
    %c0_i32 = arith.constant 0 : i32
    %c0_i32_0 = arith.constant 0 : i32
    return %arg0, %c0_i32 : i32, i32
  }
  func.func @transform_1(%arg0: i32) -> (i32, i32) {
    %c0_i32 = arith.constant 0 : i32
    %c0_i32_0 = arith.constant 0 : i32
    %c0_i32_1 = arith.constant 0 : i32
    return %c0_i32, %c0_i32_0 : i32, i32
  }
  func.func @transform_2(%arg0: i32) -> (i32, i32, i32) {
    %c0_i32 = arith.constant 0 : i32
    %c0_i32_0 = arith.constant 0 : i32
    %c0_i32_1 = arith.constant 0 : i32
    %c0_i32_2 = arith.constant 0 : i32
    return %c0_i32, %c0_i32_0, %c0_i32_1 : i32, i32, i32
  }
  func.func @transform_3(%arg0: i32) -> (i32, i32) {
    %c0_i32 = arith.constant 0 : i32
    %c0_i32_0 = arith.constant 0 : i32
    return %arg0, %c0_i32 : i32, i32
  }
}

</mosaic_0001>

<llo_original>
// kernel: tpu_custom_call.1
$region0: #{tpu_custom_call.1}
  #allocation0 [shape = 'u32[]', space=smem, size = 0x4, offset = 0x4, fixed_abs, tag = 'smem constant byte address 0x4 - core index']
  #allocation1 [shape = 'u32[144,128]{1,0:T(1,128)}', space=vmem, size = 0x12000, scoped, tag = 'internal scratch']
  %s0 = inlined_call_operand.hbm [shape: f32[8,256], index: 0, kind: input, shape index: {}]
  %s1 = inlined_call_operand.hbm [shape: f32[9,256], index: 1, kind: input, shape index: {}]
  %s2 = inlined_call_operand.hbm [shape: f32[3,8,72], index: 2, kind: input, shape index: {}]
  %s3 = inlined_call_operand.hbm [shape: f32[8,256], index: 3, kind: output, shape index: {}]
  %s4 = sld [smem:[#allocation0]]
  $region34: #{tpu_custom_call.1} parent=0
    _
  %s6 = ssub.s32 1, %s4
  %s7 = scalar_select 0, %s6, %s4
  $region1: #{tpu_custom_call.1} parent=0
    #allocation2 [shape = 'u8[8192]{0}', space=vmem, size = 0x2000, scoped, tag = 'input window, operand 0, single buffered']
    #allocation3 [shape = 's32[1]{0}', space=sflag, size = 0x4, scoped, tag = 'scoped memory for tpu_custom_call.1']
    #allocation4 [shape = 's32[1]{0}', space=sflag, size = 0x4, scoped, tag = 'scoped memory for tpu_custom_call.1']
    #allocation5 [shape = 'u8[16384]{0}', space=vmem, size = 0x4000, scoped, tag = 'input window, operand 1, single buffered']
    #allocation6 [shape = 's32[1]{0}', space=sflag, size = 0x4, scoped, tag = 'scoped memory for tpu_custom_call.1']
    #allocation7 [shape = 'u8[12288]{0}', space=vmem, size = 0x3000, scoped, tag = 'input window, operand 2, single buffered']
    #allocation8 [shape = 'u8[8192]{0}', space=vmem, size = 0x2000, scoped, tag = 'output window, operand 0, single buffered']
    %8 = vsyncpa [#allocation3], 0
    %9 = vsyncpa [#allocation6], 0
    %10 = vsyncpa [#allocation4], 0
    // Predicated region
    $region2: #{tpu_custom_call.1} parent=1 // pred_check
      _
    $region3: #{tpu_custom_call.1} parent=1 // pred_check_branch
      %12 = sbr.rel (0) target = $region5
    $region4: #{tpu_custom_call.1} parent=1 // pred_region
      %s14 = ssub.s32 256, 256
      %15 = vsyncadd [#allocation3], %s14
      %s17 = sshll.u32 [#allocation2], 4
      %s18 = int_to_ptr.vmem [resolvable:$true] %s17
      %20 = dma.hbm_to_vmem [thread:$0]  %s0, 256, %s18, [#allocation3]
    $region5: #{tpu_custom_call.1} parent=1 // pred_fallthru
      _
    // Predicated region
    $region6: #{tpu_custom_call.1} parent=1 // pred_check
      _
    $region7: #{tpu_custom_call.1} parent=1 // pred_check_branch
      %22 = sbr.rel (0) target = $region9
    $region8: #{tpu_custom_call.1} parent=1 // pred_region
      %s24 = ssub.s32 512, 512
      %25 = vsyncadd [#allocation6], %s24
      %s26 = sshll.u32 [#allocation5], 4
      %s27 = int_to_ptr.vmem [resolvable:$true] %s26
      %32 = dma.hbm_to_vmem [thread:$0]  %s1, 512, %s27, [#allocation6], 256, 256, 16
    $region9: #{tpu_custom_call.1} parent=1 // pred_fallthru
      _
    // Predicated region
    $region10: #{tpu_custom_call.1} parent=1 // pred_check
      _
    $region11: #{tpu_custom_call.1} parent=1 // pred_check_branch
      %34 = sbr.rel (0) target = $region13
    $region12: #{tpu_custom_call.1} parent=1 // pred_region
      %s36 = ssub.s32 384, 384
      %37 = vsyncadd [#allocation6], %s36
      %s38 = sshll.u32 [#allocation7], 4
      %s39 = int_to_ptr.vmem [resolvable:$true] %s38
      %44 = dma.hbm_to_vmem [thread:$0]  %s2, 384, %s39, [#allocation6], 128, 128, 8
    $region13: #{tpu_custom_call.1} parent=1 // pred_fallthru
      _
    // Predicated region
    $region14: #{tpu_custom_call.1} parent=1 // pred_check
      _
    $region15: #{tpu_custom_call.1} parent=1 // pred_check_branch
      %46 = sbr.rel (0) target = $region17
    $region16: #{tpu_custom_call.1} parent=1 // pred_region
      %47 = dma.done [#allocation3], 256
    $region17: #{tpu_custom_call.1} parent=1 // pred_fallthru
      _
    // Predicated region
    $region18: #{tpu_custom_call.1} parent=1 // pred_check
      _
    $region19: #{tpu_custom_call.1} parent=1 // pred_check_branch
      %49 = sbr.rel (0) target = $region21
    $region20: #{tpu_custom_call.1} parent=1 // pred_region
      %50 = dma.done [#allocation6], 512
    $region21: #{tpu_custom_call.1} parent=1 // pred_fallthru
      _
    // Predicated region
    $region22: #{tpu_custom_call.1} parent=1 // pred_check
      _
    $region23: #{tpu_custom_call.1} parent=1 // pred_check_branch
      %52 = sbr.rel (0) target = $region25
    $region24: #{tpu_custom_call.1} parent=1 // pred_region
      %53 = dma.done [#allocation6], 384
    $region25: #{tpu_custom_call.1} parent=1 // pred_fallthru
      _
    %v54 = vld [vmem:[#allocation2] sm:$0xff]
    %v55 = vld [vmem:[#allocation2 + $0x8] sm:$0xff]
    %v56 = vld [vmem:[#allocation5] ss:$8 sm:$0x3]
    %s57 = scalar_lea.vmem [#allocation5], 1
    %v58 = vld [vmem:[%s57] ss:$8 sm:$0x3]
    %s59 = scalar_lea.vmem [#allocation5], 2
    %v60 = vld [vmem:[%s59] ss:$8 sm:$0x3]
    %s61 = scalar_lea.vmem [#allocation5], 3
    %v62 = vld [vmem:[%s61] ss:$8 sm:$0x3]
    %s63 = scalar_lea.vmem [#allocation5], 4
    %v64 = vld [vmem:[%s63] ss:$8 sm:$0x3]
    %s65 = scalar_lea.vmem [#allocation5], 5
    %v66 = vld [vmem:[%s65] ss:$8 sm:$0x3]
    %s67 = scalar_lea.vmem [#allocation5], 6
    %v68 = vld [vmem:[%s67] ss:$8 sm:$0x3]
    %s69 = scalar_lea.vmem [#allocation5], 7
    %v70 = vld [vmem:[%s69] ss:$8 sm:$0x3]
    %s71 = scalar_lea.vmem [#allocation5], 16
    %v72 = vld [vmem:[%s71] ss:$8 sm:$0x3]
    %v73 = vld [vmem:[#allocation7] sm:$0xff]
    %74 = vrot.lane.b32.xlu0 %v54, 17
    %v75 = vpop.permute.xlu0 %74
    %76 = vrot.lane.b32.xlu0 %v55, 17
    %v77 = vpop.permute.xlu0 %76
    %v78 = vlaneseq
    %v79 = vand.u32 %v78, 127
    %vm80 = vcmp.lt.s32.totalorder %v79, 17
    %v81 = vsel %vm80, %v75, %v77
    %v82 = vsel %vm80, %v77, %v75
    %v84 = vlaneseq
    %v85 = vshrl.u32 %v84, 7
    %v86 = vsub.s32 0, %v85
    %v87 = vrot.slane %v56, %v86
    %v88 = vlaneseq
    %v89 = vshrl.u32 %v88, 7
    %v90 = vsub.s32 1, %v89
    %v91 = vrot.slane %v56, %v90
    %v94 = vmul.f32 %v82, %v87
    %v95 = vmul.f32 %v81, %v91
    %96 = vrot.lane.b32.xlu0 %v54, 16
    %v97 = vpop.permute.xlu0 %96
    %98 = vrot.lane.b32.xlu0 %v55, 16
    %v99 = vpop.permute.xlu0 %98
    %vm100 = vcmp.lt.s32.totalorder %v79, 16
    %v101 = vsel %vm100, %v97, %v99
    %v102 = vsel %vm100, %v99, %v97
    %v104 = vlaneseq
    %v105 = vshrl.u32 %v104, 7
    %v106 = vsub.s32 0, %v105
    %v107 = vrot.slane %v58, %v106
    %v108 = vlaneseq
    %v109 = vshrl.u32 %v108, 7
    %v110 = vsub.s32 1, %v109
    %v111 = vrot.slane %v58, %v110
    %v114 = vmul.f32 %v102, %v107
    %v115 = vmul.f32 %v101, %v111
    %116 = vrot.lane.b32.xlu0 %v54, 15
    %v117 = vpop.permute.xlu0 %116
    %118 = vrot.lane.b32.xlu0 %v55, 15
    %v119 = vpop.permute.xlu0 %118
    %vm120 = vcmp.lt.s32.totalorder %v79, 15
    %v121 = vsel %vm120, %v117, %v119
    %v122 = vsel %vm120, %v119, %v117
    %v124 = vlaneseq
    %v125 = vshrl.u32 %v124, 7
    %v126 = vsub.s32 0, %v125
    %v127 = vrot.slane %v60, %v126
    %v128 = vlaneseq
    %v129 = vshrl.u32 %v128, 7
    %v130 = vsub.s32 1, %v129
    %v131 = vrot.slane %v60, %v130
    %v134 = vmul.f32 %v122, %v127
    %v135 = vmul.f32 %v121, %v131
    %136 = vrot.lane.b32.xlu0 %v54, 1
    %v137 = vpop.permute.xlu0 %136
    %138 = vrot.lane.b32.xlu0 %v55, 1
    %v139 = vpop.permute.xlu0 %138
    %vm140 = vcmp.lt.s32.totalorder %v79, 1
    %v141 = vsel %vm140, %v137, %v139
    %v142 = vsel %vm140, %v139, %v137
    %v144 = vlaneseq
    %v145 = vshrl.u32 %v144, 7
    %v146 = vsub.s32 0, %v145
    %v147 = vrot.slane %v62, %v146
    %v148 = vlaneseq
    %v149 = vshrl.u32 %v148, 7
    %v150 = vsub.s32 1, %v149
    %v151 = vrot.slane %v62, %v150
    %v154 = vmul.f32 %v142, %v147
    %v155 = vmul.f32 %v141, %v151
    %v157 = vlaneseq
    %v158 = vshrl.u32 %v157, 7
    %v159 = vsub.s32 0, %v158
    %v160 = vrot.slane %v64, %v159
    %v161 = vlaneseq
    %v162 = vshrl.u32 %v161, 7
    %v163 = vsub.s32 1, %v162
    %v164 = vrot.slane %v64, %v163
    %v167 = vmul.f32 %v54, %v160
    %v168 = vmul.f32 %v55, %v164
    %169 = vrot.lane.b32.xlu0 %v54, 127
    %v170 = vpop.permute.xlu0 %169
    %171 = vrot.lane.b32.xlu0 %v55, 127
    %v172 = vpop.permute.xlu0 %171
    %vm173 = vcmp.lt.s32.totalorder %v79, 127
    %v174 = vsel %vm173, %v170, %v172
    %v175 = vsel %vm173, %v172, %v170
    %v177 = vlaneseq
    %v178 = vshrl.u32 %v177, 7
    %v179 = vsub.s32 0, %v178
    %v180 = vrot.slane %v66, %v179
    %v181 = vlaneseq
    %v182 = vshrl.u32 %v181, 7
    %v183 = vsub.s32 1, %v182
    %v184 = vrot.slane %v66, %v183
    %v187 = vmul.f32 %v174, %v180
    %v188 = vmul.f32 %v175, %v184
    %189 = vrot.lane.b32.xlu0 %v54, 113
    %v190 = vpop.permute.xlu0 %189
    %191 = vrot.lane.b32.xlu0 %v55, 113
    %v192 = vpop.permute.xlu0 %191
    %vm193 = vcmp.lt.s32.totalorder %v79, 113
    %v194 = vsel %vm193, %v190, %v192
    %v195 = vsel %vm193, %v192, %v190
    %v197 = vlaneseq
    %v198 = vshrl.u32 %v197, 7
    %v199 = vsub.s32 0, %v198
    %v200 = vrot.slane %v68, %v199
    %v201 = vlaneseq
    %v202 = vshrl.u32 %v201, 7
    %v203 = vsub.s32 1, %v202
    %v204 = vrot.slane %v68, %v203
    %v207 = vmul.f32 %v194, %v200
    %v208 = vmul.f32 %v195, %v204
    %209 = vrot.lane.b32.xlu0 %v54, 112
    %v210 = vpop.permute.xlu0 %209
    %211 = vrot.lane.b32.xlu0 %v55, 112
    %v212 = vpop.permute.xlu0 %211
    %vm213 = vcmp.lt.s32.totalorder %v79, 112
    %v214 = vsel %vm213, %v210, %v212
    %v215 = vsel %vm213, %v212, %v210
    %v217 = vlaneseq
    %v218 = vshrl.u32 %v217, 7
    %v219 = vsub.s32 0, %v218
    %v220 = vrot.slane %v70, %v219
    %v221 = vlaneseq
    %v222 = vshrl.u32 %v221, 7
    %v223 = vsub.s32 1, %v222
    %v224 = vrot.slane %v70, %v223
    %v227 = vmul.f32 %v214, %v220
    %v228 = vmul.f32 %v215, %v224
    %229 = vrot.lane.b32.xlu0 %v54, 111
    %v230 = vpop.permute.xlu0 %229
    %231 = vrot.lane.b32.xlu0 %v55, 111
    %v232 = vpop.permute.xlu0 %231
    %vm233 = vcmp.lt.s32.totalorder %v79, 111
    %v234 = vsel %vm233, %v230, %v232
    %v235 = vsel %vm233, %v232, %v230
    %v237 = vlaneseq
    %v238 = vshrl.u32 %v237, 7
    %v239 = vsub.s32 0, %v238
    %v240 = vrot.slane %v72, %v239
    %v241 = vlaneseq
    %v242 = vshrl.u32 %v241, 7
    %v243 = vsub.s32 1, %v242
    %v244 = vrot.slane %v72, %v243
    %v247 = vmul.f32 %v234, %v240
    %v248 = vmul.f32 %v235, %v244
    %vm249 = vcmask 588800
    %v251 = vsel %vm249, %v73, 0
    %253 = vmatprep.subr.mxu0 %v95
    %254 = vmatpush1.msra.mxu0 %v94
    %255 = vmatprep.subr.mxu0 %v115
    %256 = vmatpush1.msra.mxu0 %v114
    %257 = vmatprep.subr.mxu0 %v135
    %258 = vmatpush1.msra.mxu0 %v134
    %259 = vmatprep.subr.mxu0 %v155
    %260 = vmatpush1.msra.mxu0 %v154
    %261 = vmatprep.subr.mxu0 %v168
    %262 = vmatpush1.msra.mxu0 %v167
    %263 = vmatprep.subr.mxu0 %v188
    %264 = vmatpush1.msra.mxu0 %v187
    %265 = vmatprep.subr.mxu0 %v208
    %266 = vmatpush1.msra.mxu0 %v207
    %267 = vmatprep.subr.mxu0 %v228
    %268 = vmatpush1.msra.mxu0 %v227
    %269 = vmatprep.subr.mxu0 %v248
    %270 = vmatpush1.msra.mxu0 %v247
    %271 = vmatprep.subr.mxu0 0.0
    %272 = vmatpush1.msra.mxu0 0.0
    %273 = vmatprep.subr.mxu0 0.0
    %274 = vmatpush1.msra.mxu0 0.0
    %275 = vmatprep.subr.mxu0 0.0
    %276 = vmatpush1.msra.mxu0 0.0
    %277 = vmatprep.subr.mxu0 0.0
    %278 = vmatpush1.msra.mxu0 0.0
    %279 = vmatprep.subr.mxu0 0.0
    %280 = vmatpush1.msra.mxu0 0.0
    %281 = vmatprep.subr.mxu0 0.0
    %282 = vmatpush1.msra.mxu0 0.0
    %283 = vmatprep.subr.mxu0 0.0
    %284 = vmatpush1.msra.mxu0 0.0
    %285 = vmatprep.subr.mxu0 0.0
    %286 = vmatpush1.msra.mxu0 0.0
    %287 = vmatprep.subr.mxu0 0.0
    %288 = vmatpush1.msra.mxu0 0.0
    %289 = vmatprep.subr.mxu0 0.0
    %290 = vmatpush1.msra.mxu0 0.0
    %291 = vmatprep.subr.mxu0 0.0
    %292 = vmatpush1.msra.mxu0 0.0
    %293 = vmatprep.subr.mxu0 0.0
    %294 = vmatpush1.msra.mxu0 0.0
    %295 = vmatprep.subr.mxu0 0.0
    %296 = vmatpush1.msra.mxu0 0.0
    %297 = vmatprep.subr.mxu0 0.0
    %298 = vmatpush1.msra.mxu0 0.0
    %299 = vmatprep.subr.mxu0 0.0
    %300 = vmatpush1.msra.mxu0 0.0
    %301 = vmatprep.subr.mxu0 0.0
    %302 = vmatpush1.msra.mxu0 0.0
    %303 = vmatprep.subr.mxu0 0.0
    %304 = vmatpush1.msra.mxu0 0.0
    %305 = vmatprep.subr.mxu0 0.0
    %306 = vmatpush1.msra.mxu0 0.0
    %307 = vmatprep.subr.mxu0 0.0
    %308 = vmatpush1.msra.mxu0 0.0
    %309 = vmatprep.subr.mxu0 0.0
    %310 = vmatpush1.msra.mxu0 0.0
    %311 = vmatprep.subr.mxu0 0.0
    %312 = vmatpush1.msra.mxu0 0.0
    %313 = vmatprep.subr.mxu0 0.0
    %314 = vmatpush1.msra.mxu0 0.0
    %315 = vmatprep.subr.mxu0 0.0
    %316 = vmatpush1.msra.mxu0 0.0
    %317 = vmatprep.mubr.f32.mxu0 0.0
    %318 = vmatmul.mubr.f32.gmra.mrb[0].mxu0 %v251
    %v319 = vpop.f32.mrb[0].mxu0
    %v320 = vadd.f32 0.0, %v319
    %v321 = vpop.f32.mrb[0].mxu0
    %v322 = vadd.f32 0.0, %v321
    %323 = vdwg.mxu0
    %v324 = vadd.f32 %v320, %v322
    %325 = vadd.xlane.f32.xlu0 %v324
    %v326 = vpop.xlane.xlu0 %325
    %v327 = vrcp.pop 256.0
    %v328 = vmul.f32 %v326, %v327
    %v329 = vsub.f32 %v320, %v328
    %v330 = vsub.f32 %v322, %v328
    %v331 = vmul.f32 %v329, %v329
    %v332 = vmul.f32 %v330, %v330
    %v333 = vadd.f32 %v331, %v332
    %334 = vadd.xlane.f32.xlu0 %v333
    %v335 = vpop.xlane.xlu0 %334
    %v336 = vmul.f32 %v335, %v327
    %v337 = vadd.f32 %v336, 1e-05
    %v338 = vrsqrt.pop %v337
    %v339 = vmul.f32 %v329, %v338
    %v340 = vmul.f32 %v330, %v338
    %v341 = vmax.f32 %v339, 0.0
    %v342 = vmax.f32 %v340, 0.0
    %s343 = scalar_lea.vmem [#allocation7], 8
    %v344 = vld [vmem:[%s343] sm:$0xff]
    %345 = vrot.lane.b32.xlu0 %v341, 17
    %v346 = vpop.permute.xlu0 %345
    %347 = vrot.lane.b32.xlu0 %v342, 17
    %v348 = vpop.permute.xlu0 %347
    %v349 = vsel %vm80, %v346, %v348
    %v350 = vsel %vm80, %v348, %v346
    %v351 = vmul.f32 %v350, %v87
    %v352 = vmul.f32 %v349, %v91
    %353 = vrot.lane.b32.xlu0 %v341, 16
    %v354 = vpop.permute.xlu0 %353
    %355 = vrot.lane.b32.xlu0 %v342, 16
    %v356 = vpop.permute.xlu0 %355
    %v357 = vsel %vm100, %v354, %v356
    %v358 = vsel %vm100, %v356, %v354
    %v359 = vmul.f32 %v358, %v107
    %v360 = vmul.f32 %v357, %v111
    %361 = vrot.lane.b32.xlu0 %v341, 15
    %v362 = vpop.permute.xlu0 %361
    %363 = vrot.lane.b32.xlu0 %v342, 15
    %v364 = vpop.permute.xlu0 %363
    %v365 = vsel %vm120, %v362, %v364
    %v366 = vsel %vm120, %v364, %v362
    %v367 = vmul.f32 %v366, %v127
    %v368 = vmul.f32 %v365, %v131
    %369 = vrot.lane.b32.xlu0 %v341, 1
    %v370 = vpop.permute.xlu0 %369
    %371 = vrot.lane.b32.xlu0 %v342, 1
    %v372 = vpop.permute.xlu0 %371
    %v373 = vsel %vm140, %v370, %v372
    %v374 = vsel %vm140, %v372, %v370
    %v375 = vmul.f32 %v374, %v147
    %v376 = vmul.f32 %v373, %v151
    %v377 = vmul.f32 %v341, %v160
    %v378 = vmul.f32 %v342, %v164
    %379 = vrot.lane.b32.xlu0 %v341, 127
    %v380 = vpop.permute.xlu0 %379
    %381 = vrot.lane.b32.xlu0 %v342, 127
    %v382 = vpop.permute.xlu0 %381
    %v383 = vsel %vm173, %v380, %v382
    %v384 = vsel %vm173, %v382, %v380
    %v385 = vmul.f32 %v383, %v180
    %v386 = vmul.f32 %v384, %v184
    %387 = vrot.lane.b32.xlu0 %v341, 113
    %v388 = vpop.permute.xlu0 %387
    %389 = vrot.lane.b32.xlu0 %v342, 113
    %v390 = vpop.permute.xlu0 %389
    %v391 = vsel %vm193, %v388, %v390
    %v392 = vsel %vm193, %v390, %v388
    %v393 = vmul.f32 %v391, %v200
    %v394 = vmul.f32 %v392, %v204
    %395 = vrot.lane.b32.xlu0 %v341, 112
    %v396 = vpop.permute.xlu0 %395
    %397 = vrot.lane.b32.xlu0 %v342, 112
    %v398 = vpop.permute.xlu0 %397
    %v399 = vsel %vm213, %v396, %v398
    %v400 = vsel %vm213, %v398, %v396
    %v401 = vmul.f32 %v399, %v220
    %v402 = vmul.f32 %v400, %v224
    %403 = vrot.lane.b32.xlu0 %v341, 111
    %v404 = vpop.permute.xlu0 %403
    %405 = vrot.lane.b32.xlu0 %v342, 111
    %v406 = vpop.permute.xlu0 %405
    %v407 = vsel %vm233, %v404, %v406
    %v408 = vsel %vm233, %v406, %v404
    %v409 = vmul.f32 %v407, %v240
    %v410 = vmul.f32 %v408, %v244
    %v412 = vsel %vm249, %v344, 0
    %414 = vmatprep.subr.mxu0 %v352
    %415 = vmatpush1.msra.mxu0 %v351
    %416 = vmatprep.subr.mxu0 %v360
    %417 = vmatpush1.msra.mxu0 %v359
    %418 = vmatprep.subr.mxu0 %v368
    %419 = vmatpush1.msra.mxu0 %v367
    %420 = vmatprep.subr.mxu0 %v376
    %421 = vmatpush1.msra.mxu0 %v375
    %422 = vmatprep.subr.mxu0 %v378
    %423 = vmatpush1.msra.mxu0 %v377
    %424 = vmatprep.subr.mxu0 %v386
    %425 = vmatpush1.msra.mxu0 %v385
    %426 = vmatprep.subr.mxu0 %v394
    %427 = vmatpush1.msra.mxu0 %v393
    %428 = vmatprep.subr.mxu0 %v402
    %429 = vmatpush1.msra.mxu0 %v401
    %430 = vmatprep.subr.mxu0 %v410
    %431 = vmatpush1.msra.mxu0 %v409
    %432 = vmatprep.subr.mxu0 0.0
    %433 = vmatpush1.msra.mxu0 0.0
    %434 = vmatprep.subr.mxu0 0.0
    %435 = vmatpush1.msra.mxu0 0.0
    %436 = vmatprep.subr.mxu0 0.0
    %437 = vmatpush1.msra.mxu0 0.0
    %438 = vmatprep.subr.mxu0 0.0
    %439 = vmatpush1.msra.mxu0 0.0
    %440 = vmatprep.subr.mxu0 0.0
    %441 = vmatpush1.msra.mxu0 0.0
    %442 = vmatprep.subr.mxu0 0.0
    %443 = vmatpush1.msra.mxu0 0.0
    %444 = vmatprep.subr.mxu0 0.0
    %445 = vmatpush1.msra.mxu0 0.0
    %446 = vmatprep.subr.mxu0 0.0
    %447 = vmatpush1.msra.mxu0 0.0
    %448 = vmatprep.subr.mxu0 0.0
    %449 = vmatpush1.msra.mxu0 0.0
    %450 = vmatprep.subr.mxu0 0.0
    %451 = vmatpush1.msra.mxu0 0.0
    %452 = vmatprep.subr.mxu0 0.0
    %453 = vmatpush1.msra.mxu0 0.0
    %454 = vmatprep.subr.mxu0 0.0
    %455 = vmatpush1.msra.mxu0 0.0
    %456 = vmatprep.subr.mxu0 0.0
    %457 = vmatpush1.msra.mxu0 0.0
    %458 = vmatprep.subr.mxu0 0.0
    %459 = vmatpush1.msra.mxu0 0.0
    %460 = vmatprep.subr.mxu0 0.0
    %461 = vmatpush1.msra.mxu0 0.0
    %462 = vmatprep.subr.mxu0 0.0
    %463 = vmatpush1.msra.mxu0 0.0
    %464 = vmatprep.subr.mxu0 0.0
    %465 = vmatpush1.msra.mxu0 0.0
    %466 = vmatprep.subr.mxu0 0.0
    %467 = vmatpush1.msra.mxu0 0.0
    %468 = vmatprep.subr.mxu0 0.0
    %469 = vmatpush1.msra.mxu0 0.0
    %470 = vmatprep.subr.mxu0 0.0
    %471 = vmatpush1.msra.mxu0 0.0
    %472 = vmatprep.subr.mxu0 0.0
    %473 = vmatpush1.msra.mxu0 0.0
    %474 = vmatprep.subr.mxu0 0.0
    %475 = vmatpush1.msra.mxu0 0.0
    %476 = vmatprep.subr.mxu0 0.0
    %477 = vmatpush1.msra.mxu0 0.0
    %478 = vmatprep.mubr.f32.mxu0 0.0
    %479 = vmatmul.mubr.f32.gmra.mrb[0].mxu0 %v412
    %v480 = vpop.f32.mrb[0].mxu0
    %v481 = vadd.f32 0.0, %v480
    %v482 = vpop.f32.mrb[0].mxu0
    %v483 = vadd.f32 0.0, %v482
    %484 = vdwg.mxu0
    %v485 = vadd.f32 %v481, %v483
    %486 = vadd.xlane.f32.xlu0 %v485
    %v487 = vpop.xlane.xlu0 %486
    %v488 = vmul.f32 %v487, %v327
    %v489 = vsub.f32 %v481, %v488
    %v490 = vsub.f32 %v483, %v488
    %v491 = vmul.f32 %v489, %v489
    %v492 = vmul.f32 %v490, %v490
    %v493 = vadd.f32 %v491, %v492
    %494 = vadd.xlane.f32.xlu0 %v493
    %v495 = vpop.xlane.xlu0 %494
    %v496 = vmul.f32 %v495, %v327
    %v497 = vadd.f32 %v496, 1e-05
    %v498 = vrsqrt.pop %v497
    %v499 = vmul.f32 %v489, %v498
    %v500 = vmul.f32 %v490, %v498
    %v501 = vmax.f32 %v499, 0.0
    %v502 = vmax.f32 %v500, 0.0
    %s503 = scalar_lea.vmem [#allocation7], 16
    %v504 = vld [vmem:[%s503] sm:$0xff]
    %505 = vrot.lane.b32.xlu0 %v501, 17
    %v506 = vpop.permute.xlu0 %505
    %507 = vrot.lane.b32.xlu0 %v502, 17
    %v508 = vpop.permute.xlu0 %507
    %v509 = vsel %vm80, %v506, %v508
    %v510 = vsel %vm80, %v508, %v506
    %v511 = vmul.f32 %v510, %v87
    %v512 = vmul.f32 %v509, %v91
    %513 = vrot.lane.b32.xlu0 %v501, 16
    %v514 = vpop.permute.xlu0 %513
    %515 = vrot.lane.b32.xlu0 %v502, 16
    %v516 = vpop.permute.xlu0 %515
    %v517 = vsel %vm100, %v514, %v516
    %v518 = vsel %vm100, %v516, %v514
    %v519 = vmul.f32 %v518, %v107
    %v520 = vmul.f32 %v517, %v111
    %521 = vrot.lane.b32.xlu0 %v501, 15
    %v522 = vpop.permute.xlu0 %521
    %523 = vrot.lane.b32.xlu0 %v502, 15
    %v524 = vpop.permute.xlu0 %523
    %v525 = vsel %vm120, %v522, %v524
    %v526 = vsel %vm120, %v524, %v522
    %v527 = vmul.f32 %v526, %v127
    %v528 = vmul.f32 %v525, %v131
    %529 = vrot.lane.b32.xlu0 %v501, 1
    %v530 = vpop.permute.xlu0 %529
    %531 = vrot.lane.b32.xlu0 %v502, 1
    %v532 = vpop.permute.xlu0 %531
    %v533 = vsel %vm140, %v530, %v532
    %v534 = vsel %vm140, %v532, %v530
    %v535 = vmul.f32 %v534, %v147
    %v536 = vmul.f32 %v533, %v151
    %v537 = vmul.f32 %v501, %v160
    %v538 = vmul.f32 %v502, %v164
    %539 = vrot.lane.b32.xlu0 %v501, 127
    %v540 = vpop.permute.xlu0 %539
    %541 = vrot.lane.b32.xlu0 %v502, 127
    %v542 = vpop.permute.xlu0 %541
    %v543 = vsel %vm173, %v540, %v542
    %v544 = vsel %vm173, %v542, %v540
    %v545 = vmul.f32 %v543, %v180
    %v546 = vmul.f32 %v544, %v184
    %547 = vrot.lane.b32.xlu0 %v501, 113
    %v548 = vpop.permute.xlu0 %547
    %549 = vrot.lane.b32.xlu0 %v502, 113
    %v550 = vpop.permute.xlu0 %549
    %v551 = vsel %vm193, %v548, %v550
    %v552 = vsel %vm193, %v550, %v548
    %v553 = vmul.f32 %v551, %v200
    %v554 = vmul.f32 %v552, %v204
    %555 = vrot.lane.b32.xlu0 %v501, 112
    %v556 = vpop.permute.xlu0 %555
    %557 = vrot.lane.b32.xlu0 %v502, 112
    %v558 = vpop.permute.xlu0 %557
    %v559 = vsel %vm213, %v556, %v558
    %v560 = vsel %vm213, %v558, %v556
    %v561 = vmul.f32 %v559, %v220
    %v562 = vmul.f32 %v560, %v224
    %563 = vrot.lane.b32.xlu0 %v501, 111
    %v564 = vpop.permute.xlu0 %563
    %565 = vrot.lane.b32.xlu0 %v502, 111
    %v566 = vpop.permute.xlu0 %565
    %v567 = vsel %vm233, %v564, %v566
    %v568 = vsel %vm233, %v566, %v564
    %v569 = vmul.f32 %v567, %v240
    %v570 = vmul.f32 %v568, %v244
    %v572 = vsel %vm249, %v504, 0
    %574 = vmatprep.subr.mxu0 %v512
    %575 = vmatpush1.msra.mxu0 %v511
    %576 = vmatprep.subr.mxu0 %v520
    %577 = vmatpush1.msra.mxu0 %v519
    %578 = vmatprep.subr.mxu0 %v528
    %579 = vmatpush1.msra.mxu0 %v527
    %580 = vmatprep.subr.mxu0 %v536
    %581 = vmatpush1.msra.mxu0 %v535
    %582 = vmatprep.subr.mxu0 %v538
    %583 = vmatpush1.msra.mxu0 %v537
    %584 = vmatprep.subr.mxu0 %v546
    %585 = vmatpush1.msra.mxu0 %v545
    %586 = vmatprep.subr.mxu0 %v554
    %587 = vmatpush1.msra.mxu0 %v553
    %588 = vmatprep.subr.mxu0 %v562
    %589 = vmatpush1.msra.mxu0 %v561
    %590 = vmatprep.subr.mxu0 %v570
    %591 = vmatpush1.msra.mxu0 %v569
    %592 = vmatprep.subr.mxu0 0.0
    %593 = vmatpush1.msra.mxu0 0.0
    %594 = vmatprep.subr.mxu0 0.0
    %595 = vmatpush1.msra.mxu0 0.0
    %596 = vmatprep.subr.mxu0 0.0
    %597 = vmatpush1.msra.mxu0 0.0
    %598 = vmatprep.subr.mxu0 0.0
    %599 = vmatpush1.msra.mxu0 0.0
    %600 = vmatprep.subr.mxu0 0.0
    %601 = vmatpush1.msra.mxu0 0.0
    %602 = vmatprep.subr.mxu0 0.0
    %603 = vmatpush1.msra.mxu0 0.0
    %604 = vmatprep.subr.mxu0 0.0
    %605 = vmatpush1.msra.mxu0 0.0
    %606 = vmatprep.subr.mxu0 0.0
    %607 = vmatpush1.msra.mxu0 0.0
    %608 = vmatprep.subr.mxu0 0.0
    %609 = vmatpush1.msra.mxu0 0.0
    %610 = vmatprep.subr.mxu0 0.0
    %611 = vmatpush1.msra.mxu0 0.0
    %612 = vmatprep.subr.mxu0 0.0
    %613 = vmatpush1.msra.mxu0 0.0
    %614 = vmatprep.subr.mxu0 0.0
    %615 = vmatpush1.msra.mxu0 0.0
    %616 = vmatprep.subr.mxu0 0.0
    %617 = vmatpush1.msra.mxu0 0.0
    %618 = vmatprep.subr.mxu0 0.0
    %619 = vmatpush1.msra.mxu0 0.0
    %620 = vmatprep.subr.mxu0 0.0
    %621 = vmatpush1.msra.mxu0 0.0
    %622 = vmatprep.subr.mxu0 0.0
    %623 = vmatpush1.msra.mxu0 0.0
    %624 = vmatprep.subr.mxu0 0.0
    %625 = vmatpush1.msra.mxu0 0.0
    %626 = vmatprep.subr.mxu0 0.0
    %627 = vmatpush1.msra.mxu0 0.0
    %628 = vmatprep.subr.mxu0 0.0
    %629 = vmatpush1.msra.mxu0 0.0
    %630 = vmatprep.subr.mxu0 0.0
    %631 = vmatpush1.msra.mxu0 0.0
    %632 = vmatprep.subr.mxu0 0.0
    %633 = vmatpush1.msra.mxu0 0.0
    %634 = vmatprep.subr.mxu0 0.0
    %635 = vmatpush1.msra.mxu0 0.0
    %636 = vmatprep.subr.mxu0 0.0
    %637 = vmatpush1.msra.mxu0 0.0
    %638 = vmatprep.mubr.f32.mxu0 0.0
    %639 = vmatmul.mubr.f32.gmra.mrb[0].mxu0 %v572
    %v640 = vpop.f32.mrb[0].mxu0
    %v641 = vadd.f32 0.0, %v640
    %v642 = vpop.f32.mrb[0].mxu0
    %v643 = vadd.f32 0.0, %v642
    %644 = vdwg.mxu0
    %v645 = vadd.f32 %v641, %v643
    %646 = vadd.xlane.f32.xlu0 %v645
    %v647 = vpop.xlane.xlu0 %646
    %v648 = vmul.f32 %v647, %v327
    %v649 = vsub.f32 %v641, %v648
    %v650 = vsub.f32 %v643, %v648
    %v651 = vmul.f32 %v649, %v649
    %v652 = vmul.f32 %v650, %v650
    %v653 = vadd.f32 %v651, %v652
    %654 = vadd.xlane.f32.xlu0 %v653
    %v655 = vpop.xlane.xlu0 %654
    %v656 = vmul.f32 %v655, %v327
    %v657 = vadd.f32 %v656, 1e-05
    %v658 = vrsqrt.pop %v657
    %v659 = vmul.f32 %v649, %v658
    %v660 = vmul.f32 %v650, %v658
    %v661 = vadd.f32 %v659, %v54
    %v662 = vadd.f32 %v660, %v55
    %v663 = vmax.f32 %v661, 0.0
    %v664 = vmax.f32 %v662, 0.0
    %665 = vst [vmem:[#allocation8] sm:$0xff] %v663
    %666 = vst [vmem:[#allocation8 + $0x8] sm:$0xff] %v664
    // Predicated region
    $region26: #{tpu_custom_call.1} parent=1 // pred_check
      _
    $region27: #{tpu_custom_call.1} parent=1 // pred_check_branch
      %668 = sbr.rel (0) target = $region29
    $region28: #{tpu_custom_call.1} parent=1 // pred_region
      %s670 = ssub.s32 256, 256
      %671 = vsyncadd [#allocation4], %s670
      %s673 = sshll.u32 [#allocation8], 4
      %s674 = int_to_ptr.vmem [resolvable:$true] %s673
      %676 = dma.vmem_to_hbm [thread:$0]  %s674, 256, %s3, [#allocation4]
    $region29: #{tpu_custom_call.1} parent=1 // pred_fallthru
      _
    // Predicated region
    $region30: #{tpu_custom_call.1} parent=1 // pred_check
      _
    $region31: #{tpu_custom_call.1} parent=1 // pred_check_branch
      %678 = sbr.rel (0) target = $region33
    $region32: #{tpu_custom_call.1} parent=1 // pred_region
      %679 = dma.done [#allocation4], 256
    $region33: #{tpu_custom_call.1} parent=1 // pred_fallthru
      _
    %680 = vsyncpa [#allocation3], 1
    %681 = vsyncpa [#allocation6], 1
    %682 = vsyncpa [#allocation4], 1

</llo_original>
